<compile_context>
chip_gen: v5e
topology: v5e:2x2
jax: 0.10.0
libtpu: 0.0.40
codegen_flags: <defaults>
</compile_context>

<pallas_src>
import functools
import math

import jax
import jax.numpy as jnp
from jax import lax
from jax.experimental import pallas as pl
from jax.experimental.pallas import tpu as pltpu


def make_positional_encoding_table(max_len, d_model, dtype=jnp.float32):
    """Matches the PyTorch buffer: pe of shape (max_len, 1, d_model).

    Keep the table in float32 (sin/cos of large positions lose precision in
    bf16); the kernel adds in f32 and casts only at the output store.
    """
    position = jnp.arange(max_len, dtype=jnp.float32)[:, None]
    div_term = jnp.exp(
        jnp.arange(0, d_model, 2, dtype=jnp.float32) * (-math.log(10000.0) / d_model)
    )
    angles = position * div_term                       # (max_len, ceil(d_model/2))
    pe = jnp.zeros((max_len, d_model), jnp.float32)
    pe = pe.at[:, 0::2].set(jnp.sin(angles))
    pe = pe.at[:, 1::2].set(jnp.cos(angles)[:, : d_model // 2])  # odd d_model safe
    return pe[:, None, :].astype(dtype)                # (max_len, 1, d_model)


# ---------------------------------------------------------------------------
# Counter-based hash for the dropout mask (murmur3 fmix32, int32 arithmetic).
# ---------------------------------------------------------------------------
_MIX1 = -2048144789   # 0x85ebca6b as int32
_MIX2 = -1028477387   # 0xc2b2ae35 as int32
_GOLD = -1640531527   # 0x9e3779b9 as int32


def _fmix32(h):
    # murmur3 avalanche finalizer; logical shifts emulated by masking off the
    # sign-extended bits.  Integer-only VPU work, lowers on TPU and interpret.
    h = h ^ ((h >> 16) & 0xFFFF)
    h = h * _MIX1
    h = h ^ ((h >> 13) & 0x7FFFF)
    h = h * _MIX2
    h = h ^ ((h >> 16) & 0xFFFF)
    return h


# ---------------------------------------------------------------------------
# Kernels
# ---------------------------------------------------------------------------
def _pos_enc_kernel(x_ref, pe_ref, o_ref):
    # x_ref: (ts, B, D)   pe_ref: (ts, 1, D)   o_ref: (ts, B, D)
    y = x_ref[...].astype(jnp.float32) + pe_ref[...].astype(jnp.float32)
    o_ref[...] = y.astype(o_ref.dtype)


def _pos_enc_dropout_kernel(seed_ref, x_ref, pe_ref, o_ref, *, p):
    # seed_ref: SMEM (1,) int32 via scalar prefetch.
    ts, B, D = x_ref.shape
    y = x_ref[...].astype(jnp.float32) + pe_ref[...].astype(jnp.float32)

    # Hash the *global* element index so the mask is independent of tile_s /
    # grid decomposition, then compare the raw integer hash against an
    # integer threshold (no int->float convert, no extra multiply).
    s_idx = lax.broadcasted_iota(jnp.int32, (ts, B, D), 0)
    b_idx = lax.broadcasted_iota(jnp.int32, (ts, B, D), 1)
    d_idx = lax.broadcasted_iota(jnp.int32, (ts, B, D), 2)
    row0 = pl.program_id(0) * ts
    lin = ((s_idx + row0) * B + b_idx) * D + d_idx
    h = _fmix32(lin ^ (seed_ref[0] * _GOLD))
    r = h & 0x7FFFFFFF                                 # ~uniform in [0, 2^31)
    thr = min(int(round(p * (1 << 31))), (1 << 31) - 1)
    keep = r >= thr                                    # P(keep) ~= 1 - p
    scale = jnp.float32(1.0 / (1.0 - p))
    o_ref[...] = jnp.where(keep, y * scale, 0.0).astype(o_ref.dtype)
    # TODO(synk): keep-probability matches torch dropout semantics but the
    # mask does not reproduce torch's RNG stream.


# ---------------------------------------------------------------------------
# Tile sizing: (8,128)-padding-aware, double-buffered, explicit VMEM limit.
# ---------------------------------------------------------------------------
def _round_up(n, m):
    return ((n + m - 1) // m) * m


def _padded_block_bytes(tile_s, B, D, itemsize):
    # VMEM blocks are tiled (8, 128) over the last two dims; account for the
    # padding (B=2 or D<128 inflate the real footprint several-fold).
    pad_b = _round_up(B, 8)
    pad_d = _round_up(D, 128)
    x_blk = tile_s * pad_b * pad_d * itemsize          # one x (or out) block
    pe_blk = tile_s * 8 * pad_d * 4                    # pe block (tile_s,1,D), f32
    return x_blk, pe_blk


# Double-buffered pipeline budget: big enough to amortize the ~0.35 us/step
# grid overhead, small enough (with padding) to fit every generation once
# vmem_limit_bytes is pinned (v5e/v6e: 128 MiB phys, v7x: 64 MiB phys).
_PIPELINE_BUDGET_BYTES = 32 * 1024 * 1024


def _choose_tile_s(S, B, D, itemsize, budget=_PIPELINE_BUDGET_BYTES):
    x_row, pe_row = _padded_block_bytes(1, B, D, itemsize)
    per_row = 2 * x_row + pe_row                       # x-in + out + pe, per seq row
    ts = max(1, budget // (2 * per_row))               # 2x: double buffering
    return int(min(ts, S))


# ---------------------------------------------------------------------------
# Wrapper
# ---------------------------------------------------------------------------
def positional_encoding(x, pe, *, p=0.1, training=False, seed=0, tile_s=None,
                        donate_x=False):
    """x: (S, B, D), pe: (max_len, 1, D)  ->  (S, B, D)."""
    S, B, D = x.shape
    max_len = pe.shape[0]
    assert S <= max_len and pe.shape == (max_len, 1, D)

    itemsize = jnp.dtype(x.dtype).itemsize
    auto_tile = tile_s is None
    if auto_tile:
        tile_s = _choose_tile_s(S, B, D, itemsize)
    tile_s = max(1, min(int(tile_s), S))
    if auto_tile and S >= 2:
        # Keep >= 2 grid steps so ("parallel",) can use both TCs on v7x.
        tile_s = min(tile_s, -(-S // 2))
    grid = (pl.cdiv(S, tile_s),)                       # masked tail if uneven

    x_blk, pe_blk = _padded_block_bytes(tile_s, B, D, itemsize)
    pipeline_bytes = 2 * (2 * x_blk + pe_blk)          # in + out + pe, double-buffered
    vmem_limit = int(max(32 << 20, min(pipeline_bytes + (8 << 20), 48 << 20)))

    compiler_params = pltpu.CompilerParams(
        dimension_semantics=("parallel",),
        vmem_limit_bytes=vmem_limit,
    )
    cost = pl.CostEstimate(
        flops=2 * S * B * D,
        transcendentals=0,
        bytes_accessed=2 * S * B * D * itemsize + S * D * jnp.dtype(pe.dtype).itemsize,
    )
    out_shape = jax.ShapeDtypeStruct((S, B, D), x.dtype)

    if not training or p == 0.0:
        return pl.pallas_call(
            _pos_enc_kernel,
            out_shape=out_shape,
            grid_spec=pltpu.PrefetchScalarGridSpec(
                num_scalar_prefetch=0,
                grid=grid,
                in_specs=[
                    pl.BlockSpec((tile_s, B, D), lambda i: (i, 0, 0)),
                    pl.BlockSpec((tile_s, 1, D), lambda i: (i, 0, 0)),
                ],
                out_specs=pl.BlockSpec((tile_s, B, D), lambda i: (i, 0, 0)),
            ),
            compiler_params=compiler_params,
            cost_estimate=cost,
            input_output_aliases={0: 0} if donate_x else {},
        )(x, pe)

    seed_arr = jnp.asarray([seed], dtype=jnp.int32)
    return pl.pallas_call(
        functools.partial(_pos_enc_dropout_kernel, p=float(p)),
        out_shape=out_shape,
        grid_spec=pltpu.PrefetchScalarGridSpec(
            num_scalar_prefetch=1,                     # seed lands in SMEM
            grid=grid,
            in_specs=[
                pl.BlockSpec((tile_s, B, D), lambda i, seed_ref: (i, 0, 0)),
                pl.BlockSpec((tile_s, 1, D), lambda i, seed_ref: (i, 0, 0)),
            ],
            out_specs=pl.BlockSpec((tile_s, B, D), lambda i, seed_ref: (i, 0, 0)),
        ),
        compiler_params=compiler_params,
        cost_estimate=cost,
        input_output_aliases={1: 0} if donate_x else {},   # x is call-arg 1
    )(seed_arr, x, pe)


if __name__ == "__main__":
    key = jax.random.PRNGKey(0)

    # --- small shape implied by the module: (seq, batch, d_model) ---
    S, B, D = 8, 2, 32
    max_len = 64
    pe = make_positional_encoding_table(max_len, D)
    x = jax.random.normal(key, (S, B, D), dtype=jnp.float32)
    ref = x + pe[:S]

    out = positional_encoding(x, pe, training=False)
    jax.block_until_ready(out)
    assert out.shape == (S, B, D)
    assert jnp.allclose(out, ref, atol=1e-6, rtol=1e-6)

    # --- bf16 input: f32 math in-kernel, cast only at the store ---
    xb = x.astype(jnp.bfloat16)
    refb = (xb.astype(jnp.float32) + pe[:S]).astype(jnp.bfloat16)
    outb = positional_encoding(xb, pe, training=False)
    jax.block_until_ready(outb)
    assert outb.dtype == jnp.bfloat16
    assert jnp.allclose(outb.astype(jnp.float32), refb.astype(jnp.float32),
                        atol=2e-2, rtol=2e-2)

    # --- multi-step grid with an uneven tail block + donated input ---
    S2, B2, D2 = 300, 4, 128
    pe2 = make_positional_encoding_table(512, D2)
    x2 = jax.random.normal(jax.random.PRNGKey(1), (S2, B2, D2), dtype=jnp.float32)
    ref2 = x2 + pe2[:S2]                               # computed before donation
    out2 = positional_encoding(x2, pe2, training=False, tile_s=128, donate_x=True)
    jax.block_until_ready(out2)
    assert jnp.allclose(out2, ref2, atol=1e-6, rtol=1e-6)

    # --- training path: dropout via in-kernel counter-based hash ---
    p = 0.1
    ref_scaled = (x + pe[:S]) / (1.0 - p)
    out_tr = positional_encoding(x, pe, p=p, training=True, seed=1234)
    jax.block_until_ready(out_tr)
    nz = out_tr != 0.0
    # every surviving element must equal the scaled (x + pe) value
    assert jnp.allclose(jnp.where(nz, out_tr, 0.0), jnp.where(nz, ref_scaled, 0.0),
                        atol=1e-5, rtol=1e-5)
    drop_frac = float(1.0 - jnp.mean(nz.astype(jnp.float32)))
    assert 0.0 < drop_frac < 0.35                      # ~p with generous slack
    assert bool(jnp.all(jnp.isfinite(out_tr)))

    # --- odd d_model table construction no longer shape-mismatches ---
    pe_odd = make_positional_encoding_table(16, 5)
    assert pe_odd.shape == (16, 1, 5)

    print("KERNEL_OK")
</pallas_src>

<mosaic_0001>
module attributes {stable_mosaic.version = 11 : i64} {
  func.func @_pos_enc_kernel(%arg0: i32, %arg1: memref<4x2x32xf32, #tpu.memory_space<vmem>>, %arg2: memref<4x1x32xf32, #tpu.memory_space<vmem>>, %arg3: memref<4x2x32xf32, #tpu.memory_space<vmem>>) attributes {dimension_semantics = [#tpu.dimension_semantics<parallel>], iteration_bounds = array<i64: 2>, scalar_prefetch = 0 : i64, scratch_operands = 0 : i64, tpu.core_type = #tpu.core_type<tc>, window_params = [{transform_indices = @transform_0, window_bounds = array<i64: 4, 2, 32>}, {transform_indices = @transform_1, window_bounds = array<i64: 4, 1, 32>}, {transform_indices = @transform_2, window_bounds = array<i64: 4, 2, 32>}]} {
    %c0 = arith.constant 0 : index
    %c0_0 = arith.constant 0 : index
    %c0_1 = arith.constant 0 : index
    %0 = vector.load %arg1[%c0, %c0_0, %c0_1] : memref<4x2x32xf32, #tpu.memory_space<vmem>>, vector<4x2x32xf32>
    %c0_2 = arith.constant 0 : index
    %c0_3 = arith.constant 0 : index
    %c0_4 = arith.constant 0 : index
    %1 = vector.load %arg2[%c0_2, %c0_3, %c0_4] : memref<4x1x32xf32, #tpu.memory_space<vmem>>, vector<4x1x32xf32>
    %2 = vector.broadcast %1 : vector<4x1x32xf32> to vector<4x2x32xf32>
    %3 = arith.addf %0, %2 : vector<4x2x32xf32>
    %c0_5 = arith.constant 0 : index
    %c0_6 = arith.constant 0 : index
    %c0_7 = arith.constant 0 : index
    %4 = vector.load %arg3[%c0_5, %c0_6, %c0_7] : memref<4x2x32xf32, #tpu.memory_space<vmem>>, vector<4x2x32xf32>
    tpu.vector_store %arg3[%c0_5, %c0_6, %c0_7], %3 {strides = array<i32>} : memref<4x2x32xf32, #tpu.memory_space<vmem>>, vector<4x2x32xf32>,
    return
  }
  func.func @transform_0(%arg0: i32) -> (i32, i32, i32) {
    %c0_i32 = arith.constant 0 : i32
    %c0_i32_0 = arith.constant 0 : i32
    %c0_i32_1 = arith.constant 0 : i32
    return %arg0, %c0_i32, %c0_i32_0 : i32, i32, i32
  }
  func.func @transform_1(%arg0: i32) -> (i32, i32, i32) {
    %c0_i32 = arith.constant 0 : i32
    %c0_i32_0 = arith.constant 0 : i32
    %c0_i32_1 = arith.constant 0 : i32
    return %arg0, %c0_i32, %c0_i32_0 : i32, i32, i32
  }
  func.func @transform_2(%arg0: i32) -> (i32, i32, i32) {
    %c0_i32 = arith.constant 0 : i32
    %c0_i32_0 = arith.constant 0 : i32
    %c0_i32_1 = arith.constant 0 : i32
    return %arg0, %c0_i32, %c0_i32_0 : i32, i32, i32
  }
}

</mosaic_0001>

<llo_original>
// kernel: tpu_custom_call.1
$region0: #{tpu_custom_call.1}
  #allocation0 [shape = 'u32[]', space=smem, size = 0x4, offset = 0x4, fixed_abs, tag = 'smem constant byte address 0x4 - core index']
  #allocation1 [shape = 'u32[72,128]{1,0:T(1,128)}', space=vmem, size = 0x9000, scoped, tag = 'internal scratch']
  %s0 = inlined_call_operand.vmem [shape: f32[8,2,32], index: 0, kind: input, shape index: {}]
  %s1 = inlined_call_operand.vmem [shape: f32[64,1,32], index: 1, kind: input, shape index: {}]
  %s2 = inlined_call_operand.hbm [shape: f32[8,2,32], index: 2, kind: output, shape index: {}]
  %s3 = sld [smem:[#allocation0]]
  $region41: #{tpu_custom_call.1} parent=0
    _
  %s5 = ssub.s32 1, %s3
  %s6 = scalar_select 0, %s5, %s3
  $region1: #{tpu_custom_call.1} parent=0
    #allocation2 [shape = 'u8[8192]{0}', space=vmem, size = 0x2000, scoped, tag = 'output window, operand 0']
    #allocation3 [shape = 's32[2]{0}', space=sflag, size = 0x8, scoped, tag = 'scoped memory for tpu_custom_call.1']
    %7 = vsyncpa [#allocation3], 0
    %s8 = scalar_lea.sflag [#allocation3], 1
    %9 = vsyncpa %s8, 0
    loop: start=0, step=1, limit=4
    $region2: #{tpu_custom_call.1} parent=1 // loop_pre_header
      _
    $region3: #{tpu_custom_call.1} parent=1 // loop_header
      %s11 = sphi 0, %s15
      %p12 = scmp.ge.s32.totalorder %s11, 4
      %s21 = sphi 0, %s23
      %s24 = sphi 0, %s21
      %s25 = sphi 0, %s24
      %s41 = sphi 0, %s25
      %s47 = sphi 0, %s49
      %s50 = sphi 0, %s47
      %s51 = sphi 0, %s50
      %s67 = sphi 0, %s51
      %s73 = sphi 0, %s75
      %s76 = sphi 0, %s73
      %s77 = sphi 0, %s76
      %s93 = sphi 0, %s77
    $region4: #{tpu_custom_call.1} parent=1 // loop_header_branch
      %14 = sbr.rel (%p12) target = $region8
    $region5: #{tpu_custom_call.1} parent=1 // loop_body
      %s16 = ssub.s32 %s11, 1
      %s17 = ssub.s32 %s11, 2
      %s18 = sadd.s32 %s11, 1
      %s19 = ssub.s32 %s11, %s18
      %p20 = scmp.eq.s32.totalorder %s19, 0
      %s22 = sadd.s32 %s21, 1
      %s23 = scalar_select %p20, %s21, %s22
      %p26 = pneg %p20
      %p27 = scmp.eq.s32.totalorder %s11, 1
      %p28 = por %p26, %p27
      %p29 = scmp.ne.s32.totalorder %s21, %s24
      %p30 = scmp.eq.s32.totalorder %s11, 0
      %p31 = por %p29, %p30
      %p32 = scmp.ne.s32.totalorder %s21, %s24
      %p33 = scmp.eq.s32.totalorder %s16, 1
      %p34 = por %p32, %p33
      %p35 = scmp.ne.s32.totalorder %s24, %s25
      %p36 = scmp.eq.s32.totalorder %s16, 0
      %p37 = por %p35, %p36
      %p38 = scmp.ne.s32.totalorder %s24, %s25
      %p39 = scmp.eq.s32.totalorder %s17, 1
      %p40 = por %p38, %p39
      %p42 = scmp.ne.s32.totalorder %s25, %s41
      %p43 = scmp.eq.s32.totalorder %s17, 0
      %p44 = por %p42, %p43
      %s45 = ssub.s32 %s11, %s18
      %p46 = scmp.eq.s32.totalorder %s45, 0
      %s48 = sadd.s32 %s47, 1
      %s49 = scalar_select %p46, %s47, %s48
      %p52 = pneg %p46
      %p53 = scmp.eq.s32.totalorder %s11, 1
      %p54 = por %p52, %p53
      %p55 = scmp.ne.s32.totalorder %s47, %s50
      %p56 = scmp.eq.s32.totalorder %s11, 0
      %p57 = por %p55, %p56
      %p58 = scmp.ne.s32.totalorder %s47, %s50
      %p59 = scmp.eq.s32.totalorder %s16, 1
      %p60 = por %p58, %p59
      %p61 = scmp.ne.s32.totalorder %s50, %s51
      %p62 = scmp.eq.s32.totalorder %s16, 0
      %p63 = por %p61, %p62
      %p64 = scmp.ne.s32.totalorder %s50, %s51
      %p65 = scmp.eq.s32.totalorder %s17, 1
      %p66 = por %p64, %p65
      %p68 = scmp.ne.s32.totalorder %s51, %s67
      %p69 = scmp.eq.s32.totalorder %s17, 0
      %p70 = por %p68, %p69
      %s71 = ssub.s32 %s11, %s18
      %p72 = scmp.eq.s32.totalorder %s71, 0
      %s74 = sadd.s32 %s73, 1
      %s75 = scalar_select %p72, %s73, %s74
      %p78 = pneg %p72
      %p79 = scmp.eq.s32.totalorder %s11, 1
      %p80 = por %p78, %p79
      %p81 = scmp.ne.s32.totalorder %s73, %s76
      %p82 = scmp.eq.s32.totalorder %s11, 0
      %p83 = por %p81, %p82
      %p84 = scmp.ne.s32.totalorder %s73, %s76
      %p85 = scmp.eq.s32.totalorder %s16, 1
      %p86 = por %p84, %p85
      %p87 = scmp.ne.s32.totalorder %s76, %s77
      %p88 = scmp.eq.s32.totalorder %s16, 0
      %p89 = por %p87, %p88
      %p90 = scmp.ne.s32.totalorder %s76, %s77
      %p91 = scmp.eq.s32.totalorder %s17, 1
      %p92 = por %p90, %p91
      %p94 = scmp.ne.s32.totalorder %s77, %s93
      %p95 = scmp.eq.s32.totalorder %s17, 0
      %p96 = por %p94, %p95
      %p97 = scmp.le.s32.totalorder 1, %s11
      %p98 = scmp.lt.s32.totalorder %s11, 3
      %p99 = pnand %p97, %p98
      %p100 = pneg %p99
      // Predicated region
      $region9: #{tpu_custom_call.1} parent=5 // pred_check
        _
      $region10: #{tpu_custom_call.1} parent=5 // pred_check_branch
        %102 = sbr.rel (%p99) target = $region12
      $region11: #{tpu_custom_call.1} parent=5 // pred_region
        %s103 = ssub.s32 %s11, 1
      $region12: #{tpu_custom_call.1} parent=5 // pred_fallthru
        _
      %p104 = scmp.lt.s32.totalorder %s11, 2
      // Predicated region
      $region13: #{tpu_custom_call.1} parent=5 // pred_check
        %p105 = pneg %p104
      $region14: #{tpu_custom_call.1} parent=5 // pred_check_branch
        %107 = sbr.rel (%p105) target = $region16
      $region15: #{tpu_custom_call.1} parent=5 // pred_region
        // Predicated region
        $region17: #{tpu_custom_call.1} parent=15 // pred_check
          %p108 = pneg %p31
        $region18: #{tpu_custom_call.1} parent=15 // pred_check_branch
          %110 = sbr.rel (%p108) target = $region20
        $region19: #{tpu_custom_call.1} parent=15 // pred_region
          %s111 = smul.u32 4, %s11
          %p112 = scmp.lt.s32.totalorder %s111, 7
          %s113 = scalar_select %p112, %s111, 7
          %s114 = smul.addr %s113, 2
          %s115 = scalar_lea.vmem %s0, %s114
          %s116 = smul.u32 4, %s11
        $region20: #{tpu_custom_call.1} parent=15 // pred_fallthru
          _
        // Predicated region
        $region21: #{tpu_custom_call.1} parent=15 // pred_check
          %p117 = pneg %p57
        $region22: #{tpu_custom_call.1} parent=15 // pred_check_branch
          %119 = sbr.rel (%p117) target = $region24
        $region23: #{tpu_custom_call.1} parent=15 // pred_region
          %s120 = smul.u32 4, %s11
          %p121 = scmp.lt.s32.totalorder %s120, 63
          %s122 = scalar_select %p121, %s120, 63
          %s123 = scalar_lea.vmem %s1, %s122
          %s124 = smul.u32 4, %s11
        $region24: #{tpu_custom_call.1} parent=15 // pred_fallthru
          _
      $region16: #{tpu_custom_call.1} parent=5 // pred_fallthru
        _
      %p125 = scmp.le.s32.totalorder 1, %s11
      %p126 = scmp.lt.s32.totalorder %s11, 3
      %p127 = pnand %p125, %p126
      %p128 = pneg %p127
      // Predicated region
      $region25: #{tpu_custom_call.1} parent=5 // pred_check
        _
      $region26: #{tpu_custom_call.1} parent=5 // pred_check_branch
        %130 = sbr.rel (%p127) target = $region28
      $region27: #{tpu_custom_call.1} parent=5 // pred_region
        %s131 = ssub.s32 %s11, 1
        %s132 = smul.u32 4, %s16
        %p133 = scmp.lt.s32.totalorder %s132, 7
        %s134 = scalar_select %p133, %s132, 7
        %s135 = smul.addr %s134, 2
        %s136 = scalar_lea.vmem %s0, %s135
        %p137 = pneg %p37
        %p138 = pneg %p34
        %s139 = smul.u32 4, %s16
        %p140 = scmp.lt.s32.totalorder %s139, 63
        %s141 = scalar_select %p140, %s139, 63
        %s142 = scalar_lea.vmem %s1, %s141
        %p143 = pneg %p63
        %p144 = pneg %p60
        %p145 = pneg %p89
        %p146 = pneg %p86
        %s147 = sand.u32 %s76, 1
        %s148 = scalar_lea.sflag [#allocation3], %s147
        %s149 = sand.u32 %s76, 1
        %s150 = smul.addr %s149, 8
        %s151 = scalar_lea.vmem [#allocation2], %s150
        %s152 = smul.u32 4, %s16
        %p153 = scmp.lt.s32.totalorder %s152, 7
        %s154 = scalar_select %p153, %s152, 7
        %s155 = smul.addr %s154, 2
        %s156 = scalar_lea.vmem %s0, %s155
        %s157 = smul.u32 4, %s16
        %s158 = smul.u32 4, %s16
        %p159 = scmp.lt.s32.totalorder %s158, 63
        %s160 = scalar_select %p159, %s158, 63
        %s161 = scalar_lea.vmem %s1, %s160
        %s162 = smul.u32 4, %s16
        %s163 = smul.u32 4, %s16
        %v164 = vld [vmem:[%s156] sm:$0x3]
        %v165 = vld [vmem:[%s156 + $0x2] sm:$0x3]
        %v166 = vld [vmem:[%s156 + $0x4] sm:$0x3]
        %v167 = vld [vmem:[%s156 + $0x6] sm:$0x3]
        %v168 = vld [vmem:[%s161] sm:$0x1]
        %v169 = vld [vmem:[%s161 + $0x1] sm:$0x1]
        %v170 = vld [vmem:[%s161 + $0x2] sm:$0x1]
        %v171 = vld [vmem:[%s161 + $0x3] sm:$0x1]
        %v176 = vperm.slane %v168, 0
        %v177 = vperm.slane %v169, 0
        %v178 = vperm.slane %v170, 0
        %v179 = vperm.slane %v171, 0
        %v184 = vadd.f32 %v164, %v176
        %v185 = vadd.f32 %v165, %v177
        %v186 = vadd.f32 %v166, %v178
        %v187 = vadd.f32 %v167, %v179
        %vm188 = vcmask 254976
        %189 = vst.msk [vmem:[%s151] sm:$0x3] %vm188, %v184
        %190 = vst.msk [vmem:[%s151 + $0x2] sm:$0x3] %vm188, %v185
        %191 = vst.msk [vmem:[%s151 + $0x4] sm:$0x3] %vm188, %v186
        %192 = vst.msk [vmem:[%s151 + $0x6] sm:$0x3] %vm188, %v187
        %s193 = sand.u32 %s76, 1
        %s194 = scalar_lea.sflag [#allocation3], %s193
        %s195 = sand.u32 %s76, 1
        %s196 = smul.addr %s195, 8
        %s197 = scalar_lea.vmem [#allocation2], %s196
        // Predicated region
        $region29: #{tpu_custom_call.1} parent=27 // pred_check
          %p198 = pneg %p86
        $region30: #{tpu_custom_call.1} parent=27 // pred_check_branch
          %200 = sbr.rel (%p198) target = $region32
        $region31: #{tpu_custom_call.1} parent=27 // pred_region
          %s201 = smul.u32 4, %s16
          %203 = vsyncadd %s194, 0
          %s204 = smul.addr %s201, 2
          %s205 = scalar_lea.hbm %s2, %s204
          %s206 = sshll.u32 %s197, 4
          %s207 = int_to_ptr.vmem [resolvable:$true] %s206
          %s208 = sshll.u32 %s205, 4
          %s209 = int_to_ptr.hbm [resolvable:$true] %s208
          %214 = dma.vmem_to_hbm [thread:$0]  %s207, 128, %s209, %s194, 32, 32, 2
        $region32: #{tpu_custom_call.1} parent=27 // pred_fallthru
          _
      $region28: #{tpu_custom_call.1} parent=5 // pred_fallthru
        _
      %p215 = scmp.le.s32.totalorder 2, %s11
      // Predicated region
      $region33: #{tpu_custom_call.1} parent=5 // pred_check
        %p216 = pneg %p215
      $region34: #{tpu_custom_call.1} parent=5 // pred_check_branch
        %218 = sbr.rel (%p216) target = $region36
      $region35: #{tpu_custom_call.1} parent=5 // pred_region
        %s219 = ssub.s32 %s11, 2
        // Predicated region
        $region37: #{tpu_custom_call.1} parent=35 // pred_check
          %p220 = pneg %p92
        $region38: #{tpu_custom_call.1} parent=35 // pred_check_branch
          %222 = sbr.rel (%p220) target = $region40
        $region39: #{tpu_custom_call.1} parent=35 // pred_region
          %s223 = sand.u32 %s77, 1
          %s224 = scalar_lea.sflag [#allocation3], %s223
          %s225 = sand.u32 %s77, 1
          %s226 = smul.addr %s225, 8
          %s227 = scalar_lea.vmem [#allocation2], %s226
          %229 = dma.done %s224, 128
        $region40: #{tpu_custom_call.1} parent=35 // pred_fallthru
          _
      $region36: #{tpu_custom_call.1} parent=5 // pred_fallthru
        _
    $region6: #{tpu_custom_call.1} parent=1 // loop_footer
      %s15 = sadd.s32 1, %s11
    $region7: #{tpu_custom_call.1} parent=1 // loop_footer_branch
      %10 = sbr.rel target = $region3
    $region8: #{tpu_custom_call.1} parent=1 // loop_exit
      _
    %230 = vsyncpa [#allocation3], 1
    %s231 = scalar_lea.sflag [#allocation3], 1
    %232 = vsyncpa %s231, 1

</llo_original>
